<compile_context>
chip_gen: v5e
topology: v5e:2x2
jax: 0.10.0
libtpu: 0.0.40
codegen_flags: <defaults>
</compile_context>

<pallas_src>
import jax
import jax.numpy as jnp
from jax.experimental import pallas as pl
from jax.experimental.pallas import tpu as pltpu


def _round_up(x, m):
    return (x + m - 1) // m * m


def _make_kernel(margin, mode):
    margin = float(margin)

    def kernel(preds_ref, targets_ref, valid_ref, out_ref):
        p = preds_ref[...].astype(jnp.float32)    # (TILE_R, D)
        t = targets_ref[...].astype(jnp.float32)  # (TILE_R, D)
        v = valid_ref[...]                        # (TILE_R, 1) f32 in {0, 1}

        # Per-row similarities: 3 lane (XLU) reductions total.
        dot = jnp.sum(p * t, axis=-1, keepdims=True)          # <p, t>
        if mode == "Ortho":
            neg = p - dot * t
        elif mode == "Diff":
            neg = p - t
        else:
            raise ValueError(f"unsupported mode: {mode}")
        neg_sq = jnp.sum(neg * neg, axis=-1, keepdims=True)    # ||neg||^2
        p_dot_neg = jnp.sum(p * neg, axis=-1, keepdims=True)   # <p, neg>

        # F.normalize: neg / max(||neg||, 1e-12) == <p,neg> * rsqrt(max(||neg||^2, 1e-24))
        inv_norm = jax.lax.rsqrt(jnp.maximum(neg_sq, jnp.float32(1e-24)))
        sim_neg = p_dot_neg * inv_norm

        loss_row = jnp.maximum(jnp.float32(margin) + sim_neg - dot, 0.0)
        out_ref[...] = jnp.where(v > 0.5, loss_row, 0.0)       # (TILE_R, 1)

    return kernel


def synthetic_triplet_loss(preds, targets, decode_lengths, *, margin=0.5, mode="Ortho"):
    """preds, targets: (B, T, D); decode_lengths: (B,) -> scalar f32 loss."""
    B, T, D = preds.shape
    lengths = jnp.asarray(decode_lengths, dtype=jnp.int32).reshape(B)

    # Flatten rows; validity mask + num_valid derived from decode_lengths here.
    R = B * T
    p2 = preds.reshape(R, D)
    t2 = targets.reshape(R, D)
    valid = (jnp.arange(T, dtype=jnp.int32)[None, :] < lengths[:, None])
    valid = valid.astype(jnp.float32).reshape(R, 1)

    # Row tile: target ~2 MiB per input tile (generation-safe), multiple of 8.
    itemsize = jnp.dtype(preds.dtype).itemsize
    target_tile_bytes = 2 * 1024 * 1024
    tile_r = target_tile_bytes // max(1, D * itemsize)
    tile_r = int(max(8, min(1024, tile_r, _round_up(R, 8))))
    tile_r -= tile_r % 8

    r_pad = _round_up(R, tile_r)
    if r_pad != R:
        p2 = jnp.pad(p2, ((0, r_pad - R), (0, 0)))
        t2 = jnp.pad(t2, ((0, r_pad - R), (0, 0)))
        valid = jnp.pad(valid, ((0, r_pad - R), (0, 0)))  # padded rows -> invalid
    nb = r_pad // tile_r

    per_row = pl.pallas_call(
        _make_kernel(margin, mode),
        out_shape=jax.ShapeDtypeStruct((r_pad, 1), jnp.float32),
        grid=(nb,),
        in_specs=[
            pl.BlockSpec((tile_r, D), lambda i: (i, 0)),
            pl.BlockSpec((tile_r, D), lambda i: (i, 0)),
            pl.BlockSpec((tile_r, 1), lambda i: (i, 0)),
        ],
        out_specs=pl.BlockSpec((tile_r, 1), lambda i: (i, 0)),
        compiler_params=pltpu.CompilerParams(
            dimension_semantics=("parallel",),
            vmem_limit_bytes=32 * 1024 * 1024,
        ),
    )(p2, t2, valid)

    num_valid = jnp.sum(lengths).astype(jnp.float32)
    # Guard against all-zero decode_lengths (torch would produce NaN here).
    return jnp.sum(per_row) / jnp.maximum(num_valid, 1.0)


def _reference(preds, targets, decode_lengths, margin=0.5, mode="Ortho"):
    # Pure-JAX mirror of the torch module (pack -> mask; mean is order-invariant).
    p = preds.astype(jnp.float32)
    t = targets.astype(jnp.float32)
    dot = jnp.sum(p * t, axis=-1, keepdims=True)
    neg = p - dot * t if mode == "Ortho" else p - t
    norm = jnp.maximum(jnp.linalg.norm(neg, axis=-1, keepdims=True), 1e-12)
    sim_neg = jnp.sum(p * (neg / norm), axis=-1)
    lpw = jnp.maximum(margin + sim_neg - dot[..., 0], 0.0)
    B, T, _ = preds.shape
    lengths = jnp.asarray(decode_lengths, dtype=jnp.int32)
    mask = jnp.arange(T)[None, :] < lengths[:, None]
    num = jnp.maximum(jnp.sum(lengths).astype(jnp.float32), 1.0)
    return jnp.sum(jnp.where(mask, lpw, 0.0)) / num


if __name__ == "__main__":
    key = jax.random.PRNGKey(0)
    kp, kt = jax.random.split(key)

    B, T, D = 2, 8, 32
    preds = jax.random.normal(kp, (B, T, D), dtype=jnp.float32)
    targets = jax.random.normal(kt, (B, T, D), dtype=jnp.float32)
    # pack_padded_sequence (enforce_sorted=True) expects descending lengths.
    decode_lengths = jnp.array([8, 5], dtype=jnp.int32)

    for mode in ("Ortho", "Diff"):
        loss = synthetic_triplet_loss(preds, targets, decode_lengths,
                                      margin=0.5, mode=mode)
        loss = jax.block_until_ready(loss)
        ref = _reference(preds, targets, decode_lengths, margin=0.5, mode=mode)
        assert jnp.allclose(loss, ref, atol=1e-4, rtol=1e-4), (mode, loss, ref)

    print("KERNEL_OK")
</pallas_src>

<mosaic_0001>
module attributes {stable_mosaic.version = 11 : i64} {
  func.func @kernel(%arg0: i32, %arg1: memref<16x32xf32, #tpu.memory_space<vmem>>, %arg2: memref<16x32xf32, #tpu.memory_space<vmem>>, %arg3: memref<16x1xf32, #tpu.memory_space<vmem>>, %arg4: memref<16x1xf32, #tpu.memory_space<vmem>>) attributes {dimension_semantics = [#tpu.dimension_semantics<parallel>], iteration_bounds = array<i64: 1>, scalar_prefetch = 0 : i64, scratch_operands = 0 : i64, tpu.core_type = #tpu.core_type<tc>, window_params = [{transform_indices = @transform_0, window_bounds = array<i64: 16, 32>}, {transform_indices = @transform_1, window_bounds = array<i64: 16, 32>}, {transform_indices = @transform_2, window_bounds = array<i64: 16, 1>}, {transform_indices = @transform_3, window_bounds = array<i64: 16, 1>}]} {
    %c0 = arith.constant 0 : index
    %c0_0 = arith.constant 0 : index
    %0 = vector.load %arg1[%c0, %c0_0] : memref<16x32xf32, #tpu.memory_space<vmem>>, vector<16x32xf32>
    %c0_1 = arith.constant 0 : index
    %c0_2 = arith.constant 0 : index
    %1 = vector.load %arg2[%c0_1, %c0_2] : memref<16x32xf32, #tpu.memory_space<vmem>>, vector<16x32xf32>
    %c0_3 = arith.constant 0 : index
    %c0_4 = arith.constant 0 : index
    %2 = vector.load %arg3[%c0_3, %c0_4] : memref<16x1xf32, #tpu.memory_space<vmem>>, vector<16x1xf32>
    %3 = arith.mulf %0, %1 : vector<16x32xf32>
    %cst = arith.constant dense<0.000000e+00> : vector<16xf32>
    %4 = vector.multi_reduction <add>, %3, %cst [1] : vector<16x32xf32> to vector<16xf32>
    %5 = vector.shape_cast %4 : vector<16xf32> to vector<16x1xf32>
    %6 = vector.broadcast %5 : vector<16x1xf32> to vector<16x32xf32>
    %7 = arith.mulf %6, %1 : vector<16x32xf32>
    %8 = arith.subf %0, %7 : vector<16x32xf32>
    %9 = arith.mulf %8, %8 : vector<16x32xf32>
    %cst_5 = arith.constant dense<0.000000e+00> : vector<16xf32>
    %10 = vector.multi_reduction <add>, %9, %cst_5 [1] : vector<16x32xf32> to vector<16xf32>
    %11 = vector.shape_cast %10 : vector<16xf32> to vector<16x1xf32>
    %12 = arith.mulf %0, %8 : vector<16x32xf32>
    %cst_6 = arith.constant dense<0.000000e+00> : vector<16xf32>
    %13 = vector.multi_reduction <add>, %12, %cst_6 [1] : vector<16x32xf32> to vector<16xf32>
    %14 = vector.shape_cast %13 : vector<16xf32> to vector<16x1xf32>
    %cst_7 = arith.constant 1.000000e-24 : f32
    %15 = vector.broadcast %cst_7 : f32 to vector<16x1xf32>
    %16 = arith.maximumf %11, %15 : vector<16x1xf32>
    %17 = math.rsqrt %16 : vector<16x1xf32>
    %18 = arith.mulf %14, %17 : vector<16x1xf32>
    %cst_8 = arith.constant 5.000000e-01 : f32
    %19 = vector.broadcast %cst_8 : f32 to vector<16x1xf32>
    %20 = arith.addf %19, %18 : vector<16x1xf32>
    %21 = arith.subf %20, %5 : vector<16x1xf32>
    %cst_9 = arith.constant 0.000000e+00 : f32
    %22 = vector.broadcast %cst_9 : f32 to vector<16x1xf32>
    %23 = arith.maximumf %21, %22 : vector<16x1xf32>
    %cst_10 = arith.constant 5.000000e-01 : f32
    %24 = vector.broadcast %cst_10 : f32 to vector<16x1xf32>
    %25 = arith.cmpf ogt, %2, %24 : vector<16x1xf32>
    %cst_11 = arith.constant 0.000000e+00 : f32
    %26 = vector.broadcast %cst_11 : f32 to vector<16x1xf32>
    %27 = arith.select %25, %23, %26 : vector<16x1xi1>, vector<16x1xf32>
    %c0_12 = arith.constant 0 : index
    %c0_13 = arith.constant 0 : index
    %28 = vector.load %arg4[%c0_12, %c0_13] : memref<16x1xf32, #tpu.memory_space<vmem>>, vector<16x1xf32>
    tpu.vector_store %arg4[%c0_12, %c0_13], %27 {strides = array<i32>} : memref<16x1xf32, #tpu.memory_space<vmem>>, vector<16x1xf32>,
    return
  }
  func.func @transform_0(%arg0: i32) -> (i32, i32) {
    %c0_i32 = arith.constant 0 : i32
    %c0_i32_0 = arith.constant 0 : i32
    return %arg0, %c0_i32 : i32, i32
  }
  func.func @transform_1(%arg0: i32) -> (i32, i32) {
    %c0_i32 = arith.constant 0 : i32
    %c0_i32_0 = arith.constant 0 : i32
    return %arg0, %c0_i32 : i32, i32
  }
  func.func @transform_2(%arg0: i32) -> (i32, i32) {
    %c0_i32 = arith.constant 0 : i32
    %c0_i32_0 = arith.constant 0 : i32
    return %arg0, %c0_i32 : i32, i32
  }
  func.func @transform_3(%arg0: i32) -> (i32, i32) {
    %c0_i32 = arith.constant 0 : i32
    %c0_i32_0 = arith.constant 0 : i32
    return %arg0, %c0_i32 : i32, i32
  }
}

</mosaic_0001>

<llo_original>
// kernel: tpu_custom_call.1
$region0: #{tpu_custom_call.1}
  #allocation0 [shape = 'u32[]', space=smem, size = 0x4, offset = 0x4, fixed_abs, tag = 'smem constant byte address 0x4 - core index']
  #allocation1 [shape = 'u32[72,128]{1,0:T(1,128)}', space=vmem, size = 0x9000, scoped, tag = 'internal scratch']
  %s0 = inlined_call_operand.vmem [shape: f32[16,32], index: 0, kind: input, shape index: {}]
  %s1 = inlined_call_operand.hbm [shape: f32[16,32], index: 1, kind: input, shape index: {}]
  %s2 = inlined_call_operand.vmem [shape: f32[16,1], index: 2, kind: input, shape index: {}]
  %s3 = inlined_call_operand.vmem [shape: f32[16,1], index: 3, kind: output, shape index: {}]
  %s4 = sld [smem:[#allocation0]]
  $region26: #{tpu_custom_call.1} parent=0
    _
  %s6 = ssub.s32 1, %s4
  %s7 = scalar_select 0, %s6, %s4
  $region1: #{tpu_custom_call.1} parent=0
    #allocation2 [shape = 'u8[8192]{0}', space=vmem, size = 0x2000, scoped, tag = 'input window, operand 1, single buffered']
    #allocation3 [shape = 's32[1]{0}', space=sflag, size = 0x4, scoped, tag = 'scoped memory for tpu_custom_call.1']
    %8 = vsyncpa [#allocation3], 0
    // Predicated region
    $region2: #{tpu_custom_call.1} parent=1 // pred_check
      _
    $region3: #{tpu_custom_call.1} parent=1 // pred_check_branch
      %10 = sbr.rel (0) target = $region5
    $region4: #{tpu_custom_call.1} parent=1 // pred_region
      _
    $region5: #{tpu_custom_call.1} parent=1 // pred_fallthru
      _
    // Predicated region
    $region6: #{tpu_custom_call.1} parent=1 // pred_check
      _
    $region7: #{tpu_custom_call.1} parent=1 // pred_check_branch
      %12 = sbr.rel (0) target = $region9
    $region8: #{tpu_custom_call.1} parent=1 // pred_region
      %14 = vsyncadd [#allocation3], 0
      %s15 = sshll.u32 %s1, 4
      %s16 = int_to_ptr.hbm [resolvable:$true] %s15
      %s17 = sshll.u32 [#allocation2], 4
      %s18 = int_to_ptr.vmem [resolvable:$true] %s17
      %23 = dma.hbm_to_vmem [thread:$0]  %s16, 256, %s18, [#allocation3], 128, 128, 8
    $region9: #{tpu_custom_call.1} parent=1 // pred_fallthru
      _
    // Predicated region
    $region10: #{tpu_custom_call.1} parent=1 // pred_check
      _
    $region11: #{tpu_custom_call.1} parent=1 // pred_check_branch
      %25 = sbr.rel (0) target = $region13
    $region12: #{tpu_custom_call.1} parent=1 // pred_region
      _
    $region13: #{tpu_custom_call.1} parent=1 // pred_fallthru
      _
    // Predicated region
    $region14: #{tpu_custom_call.1} parent=1 // pred_check
      _
    $region15: #{tpu_custom_call.1} parent=1 // pred_check_branch
      %27 = sbr.rel (0) target = $region17
    $region16: #{tpu_custom_call.1} parent=1 // pred_region
      %29 = dma.done [#allocation3], 256
    $region17: #{tpu_custom_call.1} parent=1 // pred_fallthru
      _
    %v30 = vld [vmem:[%s0] sm:$0xff]
    %v31 = vld [vmem:[%s0 + $0x8] sm:$0xff]
    %v32 = vld [vmem:[#allocation2] sm:$0xff]
    %v33 = vld [vmem:[#allocation2 + $0x8] sm:$0xff]
    %v34 = vld [vmem:[%s2] sm:$0xff]
    %v35 = vld [vmem:[%s2 + $0x8] sm:$0xff]
    %v36 = vmul.f32 %v30, %v32
    %v37 = vmul.f32 %v31, %v33
    %vm38 = vcmask 261120
    %v39 = vsel %vm38, %v36, 0.0
    %40 = vadd.xlane.f32.xlu0 %v39
    %v41 = vpop.xlane.xlu0 %40
    %v42 = vsel %vm38, %v37, 0.0
    %43 = vadd.xlane.f32.xlu0 %v42
    %v44 = vpop.xlane.xlu0 %43
    %v45 = vmul.f32 %v41, %v32
    %v46 = vmul.f32 %v44, %v33
    %v47 = vsub.f32 %v30, %v45
    %v48 = vsub.f32 %v31, %v46
    %v49 = vmul.f32 %v47, %v47
    %v50 = vmul.f32 %v48, %v48
    %v51 = vsel %vm38, %v49, 0.0
    %52 = vadd.xlane.f32.xlu0 %v51
    %v53 = vpop.xlane.xlu0 %52
    %v54 = vsel %vm38, %v50, 0.0
    %55 = vadd.xlane.f32.xlu0 %v54
    %v56 = vpop.xlane.xlu0 %55
    %v57 = vmul.f32 %v30, %v47
    %v58 = vmul.f32 %v31, %v48
    %v59 = vsel %vm38, %v57, 0.0
    %60 = vadd.xlane.f32.xlu0 %v59
    %v61 = vpop.xlane.xlu0 %60
    %v62 = vsel %vm38, %v58, 0.0
    %63 = vadd.xlane.f32.xlu0 %v62
    %v64 = vpop.xlane.xlu0 %63
    %v65 = vmax.f32 %v53, 1e-24
    %v66 = vmax.f32 %v56, 1e-24
    %v67 = vrsqrt.pop %v65
    %v68 = vmul.f32 %v67, %v65
    %v69 = vmul.f32 %v68, %v67
    %v70 = vmul.f32 0.5, %v69
    %v71 = vsub.f32 1.5, %v70
    %v72 = vmul.f32 %v67, %v71
    %vm73 = vweird.f32 %v65
    %vm74 = vweird.f32 %v67
    %vm75 = vmor %vm73, %vm74
    %v76 = vsel %vm75, %v67, %v72
    %v77 = vrsqrt.pop %v66
    %v78 = vmul.f32 %v77, %v66
    %v79 = vmul.f32 %v78, %v77
    %v80 = vmul.f32 0.5, %v79
    %v81 = vsub.f32 1.5, %v80
    %v82 = vmul.f32 %v77, %v81
    %vm83 = vweird.f32 %v66
    %vm84 = vweird.f32 %v77
    %vm85 = vmor %vm83, %vm84
    %v86 = vsel %vm85, %v77, %v82
    %v87 = vmul.f32 %v61, %v76
    %v88 = vmul.f32 %v64, %v86
    %v89 = vadd.f32 %v87, 0.5
    %v90 = vadd.f32 %v88, 0.5
    %v91 = vsub.f32 %v89, %v41
    %v92 = vsub.f32 %v90, %v44
    %v93 = vmax.f32 %v91, 0.0
    %v94 = vmax.f32 %v92, 0.0
    %vm95 = vcmp.gt.f32.partialorder %v34, 0.5
    %vm96 = vcmp.gt.f32.partialorder %v35, 0.5
    %v97 = vsel %vm95, %v93, 0.0
    %v98 = vsel %vm96, %v94, 0.0
    %vm99 = vcmask 7168
    %100 = vst.msk [vmem:[%s3] sm:$0xff] %vm99, %v97
    %101 = vst.msk [vmem:[%s3 + $0x8] sm:$0xff] %vm99, %v98
    // Predicated region
    $region18: #{tpu_custom_call.1} parent=1 // pred_check
      _
    $region19: #{tpu_custom_call.1} parent=1 // pred_check_branch
      %103 = sbr.rel (0) target = $region21
    $region20: #{tpu_custom_call.1} parent=1 // pred_region
      _
    $region21: #{tpu_custom_call.1} parent=1 // pred_fallthru
      _
    // Predicated region
    $region22: #{tpu_custom_call.1} parent=1 // pred_check
      _
    $region23: #{tpu_custom_call.1} parent=1 // pred_check_branch
      %105 = sbr.rel (0) target = $region25
    $region24: #{tpu_custom_call.1} parent=1 // pred_region
      _
    $region25: #{tpu_custom_call.1} parent=1 // pred_fallthru
      _
    %106 = vsyncpa [#allocation3], 1

</llo_original>
